<compile_context>
chip_gen: v6e
topology: v6e:2x2x1
jax: 0.10.0
libtpu: 0.0.40
codegen_flags: <defaults>
</compile_context>

<pallas_src>
import math

import jax
import jax.numpy as jnp
from jax import lax
from jax.experimental import pallas as pl
from jax.experimental.pallas import tpu as pltpu

LORA_CONFIG = {"r": 64, "alpha": 128, "dropout": 0}


def _lora_linear_kernel(x_ref, w_ref, xa_ref, b_ref, o_ref, acc_ref):
    # x_ref  : (tm, tk)     input tile                (bf16)
    # w_ref  : (tn, tk)     weight tile, [out, in]    (bf16)
    # xa_ref : (tm, r_pad)  precomputed scaling*(x@A^T), zero-padded (bf16)
    # b_ref  : (tn, r_pad)  lora_B tile, zero-padded  (bf16)
    # o_ref  : (tm, tn)     output tile
    # acc_ref: (tm, tn)     f32 accumulator (persists across the k axis)
    k = pl.program_id(2)
    nk = pl.num_programs(2)

    @pl.when(k == 0)
    def _():
        acc_ref[...] = jnp.zeros_like(acc_ref)

    # Main contraction: x (tm, tk) . W (tn, tk)^T -> (tm, tn), accumulated
    # over k. Contracting on the last dim of both operands keeps W in its
    # native [N, K] layout (Mosaic's transposed-weight load path handles it).
    acc_ref[...] += lax.dot_general(
        x_ref[...], w_ref[...], (((1,), (1,)), ((), ())),
        preferred_element_type=jnp.float32)

    # Finalize: add the LoRA up-projection and store the lane-dense tile.
    @pl.when(k == nk - 1)
    def _():
        lora = lax.dot_general(
            xa_ref[...], b_ref[...], (((1,), (1,)), ((), ())),
            preferred_element_type=jnp.float32)
        o_ref[...] = (acc_ref[...] + lora).astype(o_ref.dtype)


def _round_up(x, m):
    return ((x + m - 1) // m) * m


def lora_linear(x, weight, lora_A, lora_B, *, scaling,
                tm=None, tn=None, tk=None, compute_dtype=jnp.bfloat16):
    """x: [B, T, in]; weight: [out, in]; lora_A: [r, in]; lora_B: [out, r]."""
    B, T, K = x.shape
    N, K2 = weight.shape
    r = lora_A.shape[0]
    assert K2 == K and lora_A.shape[1] == K and lora_B.shape == (N, r)
    M = B * T
    out_dtype = x.dtype

    # Tile selection (review): tm up to 512 (compute-bound W stream on
    # v6e/v7x; 256 already suffices on v5e), tn lane-dense multiple of 128,
    # K tiled so VMEM is independent of in_features. bf16 tiles at
    # (512, 256, 512) double-buffered are ~4 MiB -- well under the 16/32/32
    # MiB scoped-VMEM defaults of v5e/v6e/v7x.
    if tm is None:
        tm = min(512, _round_up(M, 8))
    if tn is None:
        tn = min(256, _round_up(N, 128))
    if tk is None:
        tk = min(512, _round_up(K, 128))
    tm = _round_up(tm, 8)
    tn = _round_up(tn, 128)   # never emit a lane-sparse output tile
    tk = _round_up(tk, 128)

    # Zero-pad every dimension up to a tile multiple (zeros contribute nothing
    # to either contraction) -- no degenerate / indivisible full-dim tiles.
    M_pad = _round_up(M, tm)
    N_pad = _round_up(N, tn)
    K_pad = _round_up(K, tk)
    r_pad = _round_up(max(r, 128), 128)

    x2d = x.reshape(M, K).astype(compute_dtype)
    w = weight.astype(compute_dtype)
    a = lora_A.astype(compute_dtype)
    b = lora_B.astype(compute_dtype)

    # Hoist the LoRA down-projection out of the kernel: tiny (M, r) matmul
    # with f32 accumulation; `scaling` folded here (cheap on M*r elements) so
    # the kernel needs no extra VPU work and lora_A never enters the pipeline.
    xa = jnp.dot(x2d, a.T, preferred_element_type=jnp.float32)
    xa = (scaling * xa).astype(compute_dtype)

    if (M_pad, K_pad) != (M, K):
        x2d = jnp.pad(x2d, ((0, M_pad - M), (0, K_pad - K)))
    if (N_pad, K_pad) != (N, K):
        w = jnp.pad(w, ((0, N_pad - N), (0, K_pad - K)))
    if (M_pad, r_pad) != (M, r):
        xa = jnp.pad(xa, ((0, M_pad - M), (0, r_pad - r)))
    if (N_pad, r_pad) != (N, r):
        b = jnp.pad(b, ((0, N_pad - N), (0, r_pad - r)))

    grid = (M_pad // tm, N_pad // tn, K_pad // tk)

    out2d = pl.pallas_call(
        _lora_linear_kernel,
        out_shape=jax.ShapeDtypeStruct((M_pad, N_pad), out_dtype),
        grid_spec=pltpu.PrefetchScalarGridSpec(
            num_scalar_prefetch=0,
            grid=grid,
            in_specs=[
                pl.BlockSpec((tm, tk), lambda i, j, k: (i, k)),      # x
                pl.BlockSpec((tn, tk), lambda i, j, k: (j, k)),      # W [N, K]
                pl.BlockSpec((tm, r_pad), lambda i, j, k: (i, 0)),   # xa
                pl.BlockSpec((tn, r_pad), lambda i, j, k: (j, 0)),   # lora_B
            ],
            out_specs=pl.BlockSpec((tm, tn), lambda i, j, k: (i, j)),
            scratch_shapes=[pltpu.VMEM((tm, tn), jnp.float32)],
        ),
        compiler_params=pltpu.CompilerParams(
            # Nothing is carried across i or j (only the k reduction uses the
            # accumulator), so both are megacore-parallel (v7x 2-TC win).
            dimension_semantics=("parallel", "parallel", "arbitrary")),
    )(x2d, w, xa, b)

    return out2d[:M, :N].reshape(B, T, N)


def _kaiming_uniform(key, shape, fan_in):
    # torch kaiming_uniform_(a=sqrt(5)) -> U(-1/sqrt(fan_in), 1/sqrt(fan_in))
    bound = 1.0 / math.sqrt(fan_in)
    return jax.random.uniform(key, shape, jnp.float32, minval=-bound, maxval=bound)


if __name__ == "__main__":
    # Small shapes: batch=2, seq=8, in=512, out=512, r=64.
    batch, seq = 2, 8
    in_features, out_features = 512, 512
    r, alpha = LORA_CONFIG["r"], LORA_CONFIG["alpha"]
    scaling = alpha / r

    key = jax.random.PRNGKey(0)
    k_x, k_w, k_a, k_b = jax.random.split(key, 4)

    x = jax.random.normal(k_x, (batch, seq, in_features), jnp.float32)
    weight = _kaiming_uniform(k_w, (out_features, in_features), in_features)
    lora_A = _kaiming_uniform(k_a, (r, in_features), in_features)
    # Module inits lora_B to zeros; use small deterministic values instead so
    # the LoRA branch of the kernel is actually exercised.
    lora_B = 0.01 * jax.random.normal(k_b, (out_features, r), jnp.float32)

    # TODO(synk): dropout > 0 (training-time lora_dropout) not implemented; the
    # configured dropout=0 makes it an identity in this forward pass.

    # Small tiles so the grid (i, j, k) = (1, 2, 2) exercises the k-accumulator
    # and the finalize path; tm falls back to M (=16) for this tiny test.
    y = lora_linear(x, weight, lora_A, lora_B, scaling=scaling,
                    tn=256, tk=256)
    y = jax.block_until_ready(y)

    # Reference (plain JAX, f32) of the PyTorch semantics, computed from the
    # same bf16-quantized operands the kernel consumes.
    xb = x.astype(jnp.bfloat16).astype(jnp.float32)
    wb = weight.astype(jnp.bfloat16).astype(jnp.float32)
    ab = lora_A.astype(jnp.bfloat16).astype(jnp.float32)
    bb = lora_B.astype(jnp.bfloat16).astype(jnp.float32)
    ref = (jnp.einsum("bti,oi->bto", xb, wb)
           + scaling * jnp.einsum("btr,or->bto",
                                  jnp.einsum("bti,ri->btr", xb, ab), bb))
    assert y.shape == ref.shape
    assert jnp.allclose(y, ref, atol=2e-2, rtol=2e-2), "mismatch vs reference"

    print("KERNEL_OK")
</pallas_src>

<mosaic_0001>
module attributes {stable_mosaic.version = 11 : i64} {
  func.func @_lora_linear_kernel(%arg0: i32, %arg1: i32, %arg2: i32, %arg3: memref<16x256xbf16, #tpu.memory_space<vmem>>, %arg4: memref<256x256xbf16, #tpu.memory_space<vmem>>, %arg5: memref<16x128xbf16, #tpu.memory_space<vmem>>, %arg6: memref<256x128xbf16, #tpu.memory_space<vmem>>, %arg7: memref<16x256xf32, #tpu.memory_space<vmem>>, %arg8: memref<16x256xf32, #tpu.memory_space<vmem>>) attributes {dimension_semantics = [#tpu.dimension_semantics<parallel>, #tpu.dimension_semantics<parallel>, #tpu.dimension_semantics<arbitrary>], iteration_bounds = array<i64: 1, 2, 2>, scalar_prefetch = 0 : i64, scratch_operands = 1 : i64, tpu.core_type = #tpu.core_type<tc>, window_params = [{transform_indices = @transform_0, window_bounds = array<i64: 16, 256>}, {transform_indices = @transform_1, window_bounds = array<i64: 256, 256>}, {transform_indices = @transform_2, window_bounds = array<i64: 16, 128>}, {transform_indices = @transform_3, window_bounds = array<i64: 256, 128>}, {transform_indices = @transform_4, window_bounds = array<i64: 16, 256>}]} {
    %c0_i32 = arith.constant 0 : i32
    %0 = arith.cmpi eq, %arg2, %c0_i32 : i32
    %1 = arith.extui %0 : i1 to i32
    %c0_i32_0 = arith.constant 0 : i32
    %2 = arith.cmpi ne, %1, %c0_i32_0 : i32
    scf.if %2 {
      %cst_9 = arith.constant 0.000000e+00 : f32
      %12 = vector.broadcast %cst_9 : f32 to vector<16x256xf32>
      %c0_10 = arith.constant 0 : index
      %c0_11 = arith.constant 0 : index
      %13 = vector.load %arg8[%c0_10, %c0_11] : memref<16x256xf32, #tpu.memory_space<vmem>>, vector<16x256xf32>
      tpu.vector_store %arg8[%c0_10, %c0_11], %12 {strides = array<i32>} : memref<16x256xf32, #tpu.memory_space<vmem>>, vector<16x256xf32>,
    } else {
    }
    %c0 = arith.constant 0 : index
    %c0_1 = arith.constant 0 : index
    %3 = vector.load %arg8[%c0, %c0_1] : memref<16x256xf32, #tpu.memory_space<vmem>>, vector<16x256xf32>
    %c0_2 = arith.constant 0 : index
    %c0_3 = arith.constant 0 : index
    %4 = vector.load %arg3[%c0_2, %c0_3] : memref<16x256xbf16, #tpu.memory_space<vmem>>, vector<16x256xbf16>
    %c0_4 = arith.constant 0 : index
    %c0_5 = arith.constant 0 : index
    %5 = vector.load %arg4[%c0_4, %c0_5] : memref<256x256xbf16, #tpu.memory_space<vmem>>, vector<256x256xbf16>
    %cst = arith.constant dense<0.000000e+00> : vector<16x256xf32>
    %6 = tpu.matmul %4, %5, %cst {dimension_numbers = #tpu.dot_dimension_numbers<[1], [1], [0], [0], [0, 0, 1, 0], [], []>} : vector<16x256xbf16>, vector<256x256xbf16>, vector<16x256xf32> -> vector<16x256xf32>
    %7 = arith.addf %3, %6 : vector<16x256xf32>
    %c0_6 = arith.constant 0 : index
    %c0_7 = arith.constant 0 : index
    %8 = vector.load %arg8[%c0_6, %c0_7] : memref<16x256xf32, #tpu.memory_space<vmem>>, vector<16x256xf32>
    tpu.vector_store %arg8[%c0_6, %c0_7], %7 {strides = array<i32>} : memref<16x256xf32, #tpu.memory_space<vmem>>, vector<16x256xf32>,
    %c1_i32 = arith.constant 1 : i32
    %9 = arith.cmpi eq, %arg2, %c1_i32 : i32
    %10 = arith.extui %9 : i1 to i32
    %c0_i32_8 = arith.constant 0 : i32
    %11 = arith.cmpi ne, %10, %c0_i32_8 : i32
    scf.if %11 {
      %c0_9 = arith.constant 0 : index
      %c0_10 = arith.constant 0 : index
      %12 = vector.load %arg5[%c0_9, %c0_10] : memref<16x128xbf16, #tpu.memory_space<vmem>>, vector<16x128xbf16>
      %c0_11 = arith.constant 0 : index
      %c0_12 = arith.constant 0 : index
      %13 = vector.load %arg6[%c0_11, %c0_12] : memref<256x128xbf16, #tpu.memory_space<vmem>>, vector<256x128xbf16>
      %cst_13 = arith.constant dense<0.000000e+00> : vector<16x256xf32>
      %14 = tpu.matmul %12, %13, %cst_13 {dimension_numbers = #tpu.dot_dimension_numbers<[1], [1], [0], [0], [0, 0, 1, 0], [], []>} : vector<16x128xbf16>, vector<256x128xbf16>, vector<16x256xf32> -> vector<16x256xf32>
      %c0_14 = arith.constant 0 : index
      %c0_15 = arith.constant 0 : index
      %15 = vector.load %arg8[%c0_14, %c0_15] : memref<16x256xf32, #tpu.memory_space<vmem>>, vector<16x256xf32>
      %16 = arith.addf %15, %14 : vector<16x256xf32>
      %c0_16 = arith.constant 0 : index
      %c0_17 = arith.constant 0 : index
      %17 = vector.load %arg7[%c0_16, %c0_17] : memref<16x256xf32, #tpu.memory_space<vmem>>, vector<16x256xf32>
      tpu.vector_store %arg7[%c0_16, %c0_17], %16 {strides = array<i32>} : memref<16x256xf32, #tpu.memory_space<vmem>>, vector<16x256xf32>,
    } else {
    }
    return
  }
  func.func @transform_0(%arg0: i32, %arg1: i32, %arg2: i32) -> (i32, i32) {
    %c0_i32 = arith.constant 0 : i32
    return %arg0, %arg2 : i32, i32
  }
  func.func @transform_1(%arg0: i32, %arg1: i32, %arg2: i32) -> (i32, i32) {
    %c0_i32 = arith.constant 0 : i32
    return %arg1, %arg2 : i32, i32
  }
  func.func @transform_2(%arg0: i32, %arg1: i32, %arg2: i32) -> (i32, i32) {
    %c0_i32 = arith.constant 0 : i32
    %c0_i32_0 = arith.constant 0 : i32
    return %arg0, %c0_i32 : i32, i32
  }
  func.func @transform_3(%arg0: i32, %arg1: i32, %arg2: i32) -> (i32, i32) {
    %c0_i32 = arith.constant 0 : i32
    %c0_i32_0 = arith.constant 0 : i32
    return %arg1, %c0_i32 : i32, i32
  }
  func.func @transform_4(%arg0: i32, %arg1: i32, %arg2: i32) -> (i32, i32) {
    %c0_i32 = arith.constant 0 : i32
    return %arg0, %arg1 : i32, i32
  }
}

</mosaic_0001>

<llo_original>
// kernel: tpu_custom_call.1
$region0: #{tpu_custom_call.1}
  #allocation0 [shape = 'u32[]', space=smem, size = 0x4, offset = 0x4, fixed_abs, tag = 'smem constant byte address 0x4 - core index']
  #allocation1 [shape = 'u32[144,128]{1,0:T(1,128)}', space=vmem, size = 0x12000, scoped, tag = 'internal scratch']
  #allocation2 [shape = 'f32[16,256]{1,0:T(8,128)}', space=vmem, size = 0x4000, scoped, tag = 'scratch operand']
  %s0 = inlined_call_operand.hbm [shape: bf16[16,512], index: 0, kind: input, shape index: {}]
  %s1 = inlined_call_operand.hbm [shape: bf16[512,512], index: 1, kind: input, shape index: {}]
  %s2 = inlined_call_operand.hbm [shape: bf16[16,128], index: 2, kind: input, shape index: {}]
  %s3 = inlined_call_operand.hbm [shape: bf16[512,128], index: 3, kind: input, shape index: {}]
  %s4 = inlined_call_operand.hbm [shape: f32[16,512], index: 4, kind: output, shape index: {}]
  %s5 = sld [smem:[#allocation0]]
  $region73: #{tpu_custom_call.1} parent=0
    _
  %s7 = ssub.s32 1, %s5
  %s8 = scalar_select 0, %s7, %s5
  $region1: #{tpu_custom_call.1} parent=0
    #allocation3 [shape = 'u8[16384]{0}', space=vmem, size = 0x4000, scoped, tag = 'input window, operand 0']
    #allocation4 [shape = 's32[2]{0}', space=sflag, size = 0x8, scoped, tag = 'scoped memory for tpu_custom_call.1']
    #allocation5 [shape = 's32[2]{0}', space=sflag, size = 0x8, scoped, tag = 'scoped memory for tpu_custom_call.1']
    #allocation6 [shape = 'u8[262144]{0}', space=vmem, size = 0x40000, scoped, tag = 'input window, operand 1']
    #allocation7 [shape = 's32[2]{0}', space=sflag, size = 0x8, scoped, tag = 'scoped memory for tpu_custom_call.1']
    #allocation8 [shape = 'u8[4096]{0}', space=vmem, size = 0x1000, scoped, tag = 'input window, operand 2, single buffered']
    #allocation9 [shape = 'u8[131072]{0}', space=vmem, size = 0x20000, scoped, tag = 'input window, operand 3']
    #allocation10 [shape = 's32[2]{0}', space=sflag, size = 0x8, scoped, tag = 'scoped memory for tpu_custom_call.1']
    #allocation11 [shape = 'u8[32768]{0}', space=vmem, size = 0x8000, scoped, tag = 'output window, operand 0']
    %9 = vsyncpa [#allocation4], 0
    %s10 = scalar_lea.sflag [#allocation4], 1
    %11 = vsyncpa %s10, 0
    %12 = vsyncpa [#allocation7], 0
    %s13 = scalar_lea.sflag [#allocation7], 1
    %14 = vsyncpa %s13, 0
    %15 = vsyncpa [#allocation10], 0
    %s16 = scalar_lea.sflag [#allocation10], 1
    %17 = vsyncpa %s16, 0
    %18 = vsyncpa [#allocation5], 0
    %s19 = scalar_lea.sflag [#allocation5], 1
    %20 = vsyncpa %s19, 0
    loop: start=0, step=1, limit=6
    $region2: #{tpu_custom_call.1} parent=1 // loop_pre_header
      _
    $region3: #{tpu_custom_call.1} parent=1 // loop_header
      %s22 = sphi 0, %s26
      %p23 = scmp.ge.s32.totalorder %s22, 6
      %s29 = sphi 0, %s48
      %s30 = sphi 0, %s44
      %s31 = sphi 0, %s40
      %s32 = sphi 0, %s29
      %s33 = sphi 0, %s30
      %s34 = sphi 0, %s31
      %s35 = sphi 0, %s32
      %s36 = sphi 0, %s33
      %s37 = sphi 0, %s34
      %s53 = sphi 0, %s55
      %s56 = sphi 0, %s53
      %s57 = sphi 0, %s56
      %s73 = sphi 0, %s57
      %s81 = sphi 0, %s83
      %s84 = sphi 0, %s81
      %s85 = sphi 0, %s84
      %s101 = sphi 0, %s85
      %s107 = sphi 0, %s109
      %s110 = sphi 0, %s107
      %s111 = sphi 0, %s110
      %s127 = sphi 0, %s111
      %s133 = sphi 0, %s135
      %s136 = sphi 0, %s133
      %s137 = sphi 0, %s136
      %s153 = sphi 0, %s137
      %s161 = sphi 0, %s163
      %s164 = sphi 0, %s161
      %s165 = sphi 0, %s164
      %s181 = sphi 0, %s165
    $region4: #{tpu_custom_call.1} parent=1 // loop_header_branch
      %25 = sbr.rel (%p23) target = $region8
    $region5: #{tpu_custom_call.1} parent=1 // loop_body
      %s27 = ssub.s32 %s22, 1
      %s28 = ssub.s32 %s22, 2
      %s38 = sadd.s32 1, %s31
      %p39 = scmp.ge.s32.totalorder %s38, 2
      %s40 = scalar_select %p39, 0, %s38
      %s41 = sadd.s32 1, %s30
      %s42 = scalar_select %p39, %s41, %s30
      %p43 = scmp.ge.s32.totalorder %s42, 2
      %s44 = scalar_select %p43, 0, %s42
      %s45 = sadd.s32 1, %s29
      %s46 = scalar_select %p43, %s45, %s29
      %p47 = scmp.ge.s32.totalorder %s46, 1
      %s48 = scalar_select %p47, 0, %s46
      %s49 = ssub.s32 %s29, %s48
      %s50 = ssub.s32 %s31, %s40
      %s51 = sor.u32 %s49, %s50
      %p52 = scmp.eq.s32.totalorder %s51, 0
      %s54 = sadd.s32 %s53, 1
      %s55 = scalar_select %p52, %s53, %s54
      %p58 = pneg %p52
      %p59 = scmp.eq.s32.totalorder %s22, 3
      %p60 = por %p58, %p59
      %p61 = scmp.ne.s32.totalorder %s53, %s56
      %p62 = scmp.eq.s32.totalorder %s22, 0
      %p63 = por %p61, %p62
      %p64 = scmp.ne.s32.totalorder %s53, %s56
      %p65 = scmp.eq.s32.totalorder %s27, 3
      %p66 = por %p64, %p65
      %p67 = scmp.ne.s32.totalorder %s56, %s57
      %p68 = scmp.eq.s32.totalorder %s27, 0
      %p69 = por %p67, %p68
      %p70 = scmp.ne.s32.totalorder %s56, %s57
      %p71 = scmp.eq.s32.totalorder %s28, 3
      %p72 = por %p70, %p71
      %p74 = scmp.ne.s32.totalorder %s57, %s73
      %p75 = scmp.eq.s32.totalorder %s28, 0
      %p76 = por %p74, %p75
      %s77 = ssub.s32 %s30, %s44
      %s78 = ssub.s32 %s31, %s40
      %s79 = sor.u32 %s77, %s78
      %p80 = scmp.eq.s32.totalorder %s79, 0
      %s82 = sadd.s32 %s81, 1
      %s83 = scalar_select %p80, %s81, %s82
      %p86 = pneg %p80
      %p87 = scmp.eq.s32.totalorder %s22, 3
      %p88 = por %p86, %p87
      %p89 = scmp.ne.s32.totalorder %s81, %s84
      %p90 = scmp.eq.s32.totalorder %s22, 0
      %p91 = por %p89, %p90
      %p92 = scmp.ne.s32.totalorder %s81, %s84
      %p93 = scmp.eq.s32.totalorder %s27, 3
      %p94 = por %p92, %p93
      %p95 = scmp.ne.s32.totalorder %s84, %s85
      %p96 = scmp.eq.s32.totalorder %s27, 0
      %p97 = por %p95, %p96
      %p98 = scmp.ne.s32.totalorder %s84, %s85
      %p99 = scmp.eq.s32.totalorder %s28, 3
      %p100 = por %p98, %p99
      %p102 = scmp.ne.s32.totalorder %s85, %s101
      %p103 = scmp.eq.s32.totalorder %s28, 0
      %p104 = por %p102, %p103
      %s105 = ssub.s32 %s29, %s48
      %p106 = scmp.eq.s32.totalorder %s105, 0
      %s108 = sadd.s32 %s107, 1
      %s109 = scalar_select %p106, %s107, %s108
      %p112 = pneg %p106
      %p113 = scmp.eq.s32.totalorder %s22, 3
      %p114 = por %p112, %p113
      %p115 = scmp.ne.s32.totalorder %s107, %s110
      %p116 = scmp.eq.s32.totalorder %s22, 0
      %p117 = por %p115, %p116
      %p118 = scmp.ne.s32.totalorder %s107, %s110
      %p119 = scmp.eq.s32.totalorder %s27, 3
      %p120 = por %p118, %p119
      %p121 = scmp.ne.s32.totalorder %s110, %s111
      %p122 = scmp.eq.s32.totalorder %s27, 0
      %p123 = por %p121, %p122
      %p124 = scmp.ne.s32.totalorder %s110, %s111
      %p125 = scmp.eq.s32.totalorder %s28, 3
      %p126 = por %p124, %p125
      %p128 = scmp.ne.s32.totalorder %s111, %s127
      %p129 = scmp.eq.s32.totalorder %s28, 0
      %p130 = por %p128, %p129
      %s131 = ssub.s32 %s30, %s44
      %p132 = scmp.eq.s32.totalorder %s131, 0
      %s134 = sadd.s32 %s133, 1
      %s135 = scalar_select %p132, %s133, %s134
      %p138 = pneg %p132
      %p139 = scmp.eq.s32.totalorder %s22, 3
      %p140 = por %p138, %p139
      %p141 = scmp.ne.s32.totalorder %s133, %s136
      %p142 = scmp.eq.s32.totalorder %s22, 0
      %p143 = por %p141, %p142
      %p144 = scmp.ne.s32.totalorder %s133, %s136
      %p145 = scmp.eq.s32.totalorder %s27, 3
      %p146 = por %p144, %p145
      %p147 = scmp.ne.s32.totalorder %s136, %s137
      %p148 = scmp.eq.s32.totalorder %s27, 0
      %p149 = por %p147, %p148
      %p150 = scmp.ne.s32.totalorder %s136, %s137
      %p151 = scmp.eq.s32.totalorder %s28, 3
      %p152 = por %p150, %p151
      %p154 = scmp.ne.s32.totalorder %s137, %s153
      %p155 = scmp.eq.s32.totalorder %s28, 0
      %p156 = por %p154, %p155
      %s157 = ssub.s32 %s29, %s48
      %s158 = ssub.s32 %s30, %s44
      %s159 = sor.u32 %s157, %s158
      %p160 = scmp.eq.s32.totalorder %s159, 0
      %s162 = sadd.s32 %s161, 1
      %s163 = scalar_select %p160, %s161, %s162
      %p166 = pneg %p160
      %p167 = scmp.eq.s32.totalorder %s22, 3
      %p168 = por %p166, %p167
      %p169 = scmp.ne.s32.totalorder %s161, %s164
      %p170 = scmp.eq.s32.totalorder %s22, 0
      %p171 = por %p169, %p170
      %p172 = scmp.ne.s32.totalorder %s161, %s164
      %p173 = scmp.eq.s32.totalorder %s27, 3
      %p174 = por %p172, %p173
      %p175 = scmp.ne.s32.totalorder %s164, %s165
      %p176 = scmp.eq.s32.totalorder %s27, 0
      %p177 = por %p175, %p176
      %p178 = scmp.ne.s32.totalorder %s164, %s165
      %p179 = scmp.eq.s32.totalorder %s28, 3
      %p180 = por %p178, %p179
      %p182 = scmp.ne.s32.totalorder %s165, %s181
      %p183 = scmp.eq.s32.totalorder %s28, 0
      %p184 = por %p182, %p183
      %p185 = scmp.le.s32.totalorder 1, %s22
      %p186 = scmp.lt.s32.totalorder %s22, 5
      %p187 = pnand %p185, %p186
      %p188 = pneg %p187
      // Predicated region
      $region9: #{tpu_custom_call.1} parent=5 // pred_check
        _
      $region10: #{tpu_custom_call.1} parent=5 // pred_check_branch
        %190 = sbr.rel (%p187) target = $region12
      $region11: #{tpu_custom_call.1} parent=5 // pred_region
        %s191 = ssub.s32 %s22, 1
        // Predicated region
        $region13: #{tpu_custom_call.1} parent=11 // pred_check
          %p192 = pneg %p123
        $region14: #{tpu_custom_call.1} parent=11 // pred_check_branch
          %194 = sbr.rel (%p192) target = $region16
        $region15: #{tpu_custom_call.1} parent=11 // pred_region
          %s195 = smul.u32 2, %s32
          %s197 = ssub.s32 128, 128
          %198 = vsyncadd [#allocation7], %s197
          %s199 = smul.addr %s195, 64
          %s200 = scalar_lea.hbm %s2, %s199
          %s201 = sshll.u32 [#allocation8], 4
          %s202 = int_to_ptr.vmem [resolvable:$true] %s201
          %207 = dma.hbm_to_vmem [thread:$0]  %s200, 128, %s202, [#allocation7], 64, 64, 4
        $region16: #{tpu_custom_call.1} parent=11 // pred_fallthru
          _
      $region12: #{tpu_custom_call.1} parent=5 // pred_fallthru
        _
      %p208 = scmp.lt.s32.totalorder %s22, 4
      // Predicated region
      $region17: #{tpu_custom_call.1} parent=5 // pred_check
        %p209 = pneg %p208
      $region18: #{tpu_custom_call.1} parent=5 // pred_check_branch
        %211 = sbr.rel (%p209) target = $region20
      $region19: #{tpu_custom_call.1} parent=5 // pred_region
        // Predicated region
        $region21: #{tpu_custom_call.1} parent=19 // pred_check
          %p212 = pneg %p63
        $region22: #{tpu_custom_call.1} parent=19 // pred_check_branch
          %214 = sbr.rel (%p212) target = $region24
        $region23: #{tpu_custom_call.1} parent=19 // pred_region
          %s215 = sand.u32 %s53, 1
          %s216 = scalar_lea.sflag [#allocation4], %s215
          %s217 = sand.u32 %s53, 1
          %s218 = smul.addr %s217, 16
          %s219 = scalar_lea.vmem [#allocation3], %s218
          %s220 = smul.u32 2, %s29
          %s221 = smul.u32 2, %s31
          %s223 = ssub.s32 256, 256
          %224 = vsyncadd %s216, %s223
          %s225 = smul.addr %s220, 4
          %s226 = sadd.s32 %s221, %s225
          %s227 = smul.addr %s226, 64
          %s228 = scalar_lea.hbm %s0, %s227
          %s229 = sshll.u32 %s219, 4
          %s230 = int_to_ptr.vmem [resolvable:$true] %s229
          %235 = dma.hbm_to_vmem [thread:$0]  %s228, 256, %s230, %s216, 256, 128, 8
        $region24: #{tpu_custom_call.1} parent=19 // pred_fallthru
          _
        // Predicated region
        $region25: #{tpu_custom_call.1} parent=19 // pred_check
          %p236 = pneg %p91
        $region26: #{tpu_custom_call.1} parent=19 // pred_check_branch
          %238 = sbr.rel (%p236) target = $region28
        $region27: #{tpu_custom_call.1} parent=19 // pred_region
          %s239 = sand.u32 %s22, 1
          %s240 = scalar_lea.sflag [#allocation7], %s239
          %s241 = sand.u32 %s81, 1
          %s242 = smul.addr %s241, 256
          %s243 = scalar_lea.vmem [#allocation6], %s242
          %s244 = smul.u32 32, %s30
          %s245 = smul.u32 2, %s31
          %s247 = ssub.s32 4096, 4096
          %248 = vsyncadd %s240, %s247
          %s249 = smul.addr %s244, 4
          %s250 = sadd.s32 %s245, %s249
          %s251 = smul.addr %s250, 64
          %s252 = scalar_lea.hbm %s1, %s251
          %s253 = sshll.u32 %s243, 4
          %s254 = int_to_ptr.vmem [resolvable:$true] %s253
          %259 = dma.hbm_to_vmem [thread:$0]  %s252, 4096, %s254, %s240, 256, 128, 8
        $region28: #{tpu_custom_call.1} parent=19 // pred_fallthru
          _
        // Predicated region
        $region29: #{tpu_custom_call.1} parent=19 // pred_check
          %p260 = pneg %p143
        $region30: #{tpu_custom_call.1} parent=19 // pred_check_branch
          %262 = sbr.rel (%p260) target = $region32
        $region31: #{tpu_custom_call.1} parent=19 // pred_region
          %s263 = sand.u32 %s133, 1
          %s264 = scalar_lea.sflag [#allocation10], %s263
          %s265 = sand.u32 %s133, 1
          %s266 = smul.addr %s265, 128
          %s267 = scalar_lea.vmem [#allocation9], %s266
          %s268 = smul.u32 32, %s30
          %s270 = ssub.s32 2048, 2048
          %271 = vsyncadd %s264, %s270
          %s272 = smul.addr %s268, 64
          %s273 = scalar_lea.hbm %s3, %s272
          %s274 = sshll.u32 %s267, 4
          %s275 = int_to_ptr.vmem [resolvable:$true] %s274
          %280 = dma.hbm_to_vmem [thread:$0]  %s273, 2048, %s275, %s264, 64, 64, 4
        $region32: #{tpu_custom_call.1} parent=19 // pred_fallthru
          _
      $region20: #{tpu_custom_call.1} parent=5 // pred_fallthru
        _
      %p281 = scmp.le.s32.totalorder 1, %s22
      %p282 = scmp.lt.s32.totalorder %s22, 5
      %p283 = pnand %p281, %p282
      %p284 = pneg %p283
      // Predicated region
      $region33: #{tpu_custom_call.1} parent=5 // pred_check
        _
      $region34: #{tpu_custom_call.1} parent=5 // pred_check_branch
        %286 = sbr.rel (%p283) target = $region36
      $region35: #{tpu_custom_call.1} parent=5 // pred_region
        %s287 = ssub.s32 %s22, 1
        %s288 = sand.u32 %s56, 1
        %s289 = scalar_lea.sflag [#allocation4], %s288
        %s290 = sand.u32 %s56, 1
        %s291 = smul.addr %s290, 16
        %s292 = scalar_lea.vmem [#allocation3], %s291
        // Predicated region
        $region37: #{tpu_custom_call.1} parent=35 // pred_check
          %p293 = pneg %p69
        $region38: #{tpu_custom_call.1} parent=35 // pred_check_branch
          %295 = sbr.rel (%p293) target = $region40
        $region39: #{tpu_custom_call.1} parent=35 // pred_region
          %296 = dma.done %s289, 256
        $region40: #{tpu_custom_call.1} parent=35 // pred_fallthru
          _
        %s297 = sand.u32 %s27, 1
        %s298 = scalar_lea.sflag [#allocation7], %s297
        %s299 = sand.u32 %s84, 1
        %s300 = smul.addr %s299, 256
        %s301 = scalar_lea.vmem [#allocation6], %s300
        // Predicated region
        $region41: #{tpu_custom_call.1} parent=35 // pred_check
          %p302 = pneg %p97
        $region42: #{tpu_custom_call.1} parent=35 // pred_check_branch
          %304 = sbr.rel (%p302) target = $region44
        $region43: #{tpu_custom_call.1} parent=35 // pred_region
          %305 = dma.done %s298, 4096
        $region44: #{tpu_custom_call.1} parent=35 // pred_fallthru
          _
        // Predicated region
        $region45: #{tpu_custom_call.1} parent=35 // pred_check
          %p306 = pneg %p123
        $region46: #{tpu_custom_call.1} parent=35 // pred_check_branch
          %308 = sbr.rel (%p306) target = $region48
        $region47: #{tpu_custom_call.1} parent=35 // pred_region
          %309 = dma.done [#allocation7], 128
        $region48: #{tpu_custom_call.1} parent=35 // pred_fallthru
          _
        %s310 = sand.u32 %s136, 1
        %s311 = scalar_lea.sflag [#allocation10], %s310
        %s312 = sand.u32 %s136, 1
        %s313 = smul.addr %s312, 128
        %s314 = scalar_lea.vmem [#allocation9], %s313
        // Predicated region
        $region49: #{tpu_custom_call.1} parent=35 // pred_check
          %p315 = pneg %p149
        $region50: #{tpu_custom_call.1} parent=35 // pred_check_branch
          %317 = sbr.rel (%p315) target = $region52
        $region51: #{tpu_custom_call.1} parent=35 // pred_region
          %318 = dma.done %s311, 2048
        $region52: #{tpu_custom_call.1} parent=35 // pred_fallthru
          _
        %s319 = sand.u32 %s56, 1
        %s320 = scalar_lea.sflag [#allocation4], %s319
        %s321 = sand.u32 %s56, 1
        %s322 = smul.addr %s321, 16
        %s323 = scalar_lea.vmem [#allocation3], %s322
        %p324 = pneg %p69
        %p325 = pneg %p66
        %s326 = sand.u32 %s27, 1
        %s327 = scalar_lea.sflag [#allocation7], %s326
        %s328 = sand.u32 %s84, 1
        %s329 = smul.addr %s328, 256
        %s330 = scalar_lea.vmem [#allocation6], %s329
        %p331 = pneg %p97
        %p332 = pneg %p94
        %p333 = pneg %p123
        %p334 = pneg %p120
        %s335 = sand.u32 %s136, 1
        %s336 = scalar_lea.sflag [#allocation10], %s335
        %s337 = sand.u32 %s136, 1
        %s338 = smul.addr %s337, 128
        %s339 = scalar_lea.vmem [#allocation9], %s338
        %p340 = pneg %p149
        %p341 = pneg %p146
        %p342 = pneg %p177
        %p343 = pneg %p174
        %s344 = sand.u32 %s164, 1
        %s345 = scalar_lea.sflag [#allocation5], %s344
        %s346 = sand.u32 %s164, 1
        %s347 = smul.addr %s346, 32
        %s348 = scalar_lea.vmem [#allocation11], %s347
        %s349 = smul.u32 2, %s32
        %s350 = smul.u32 2, %s34
        %s351 = smul.u32 32, %s33
        %s352 = smul.u32 2, %s34
        %s353 = smul.u32 2, %s32
        %s354 = smul.u32 32, %s33
        %s355 = smul.u32 2, %s32
        %s356 = smul.u32 2, %s33
        %p358 = scmp.eq.s32.totalorder %s34, 0
        // Predicated region
        $region53: #{tpu_custom_call.1} parent=35 // pred_check
          %p359 = pneg %p358
        $region54: #{tpu_custom_call.1} parent=35 // pred_check_branch
          %361 = sbr.rel (%p359) target = $region56
        $region55: #{tpu_custom_call.1} parent=35 // pred_region
          %362 = vst [vmem:[#allocation2] sm:$0xff] 0.0
          %363 = vst [vmem:[#allocation2 + $0x8] sm:$0xff] 0.0
          %364 = vst [vmem:[#allocation2 + $0x10] sm:$0xff] 0.0
          %365 = vst [vmem:[#allocation2 + $0x18] sm:$0xff] 0.0
        $region56: #{tpu_custom_call.1} parent=35 // pred_fallthru
          _
        %v366 = vld [vmem:[#allocation2] sm:$0xff]
        %v367 = vld [vmem:[#allocation2 + $0x8] sm:$0xff]
        %v368 = vld [vmem:[#allocation2 + $0x10] sm:$0xff]
        %v369 = vld [vmem:[#allocation2 + $0x18] sm:$0xff]
        %v370 = vld [vmem:[%s292] sm:$0xff]
        %v371 = vld [vmem:[%s292 + $0x8] sm:$0xff]
        %v372 = vld [vmem:[%s301] sm:$0xff]
        %v373 = vld [vmem:[%s301 + $0x8] sm:$0xff]
        %v374 = vld [vmem:[%s301 + $0x10] sm:$0xff]
        %v375 = vld [vmem:[%s301 + $0x18] sm:$0xff]
        %v376 = vld [vmem:[%s301 + $0x20] sm:$0xff]
        %v377 = vld [vmem:[%s301 + $0x28] sm:$0xff]
        %v378 = vld [vmem:[%s301 + $0x30] sm:$0xff]
        %v379 = vld [vmem:[%s301 + $0x38] sm:$0xff]
        %v380 = vld [vmem:[%s301 + $0x40] sm:$0xff]
        %v381 = vld [vmem:[%s301 + $0x48] sm:$0xff]
        %v382 = vld [vmem:[%s301 + $0x50] sm:$0xff]
        %v383 = vld [vmem:[%s301 + $0x58] sm:$0xff]
        %v384 = vld [vmem:[%s301 + $0x60] sm:$0xff]
        %v385 = vld [vmem:[%s301 + $0x68] sm:$0xff]
        %v386 = vld [vmem:[%s301 + $0x70] sm:$0xff]
        %v387 = vld [vmem:[%s301 + $0x78] sm:$0xff]
        %v388 = vld [vmem:[%s301 + $0x80] sm:$0xff]
        %v389 = vld [vmem:[%s301 + $0x88] sm:$0xff]
        %v390 = vld [vmem:[%s301 + $0x90] sm:$0xff]
        %v391 = vld [vmem:[%s301 + $0x98] sm:$0xff]
        %v392 = vld [vmem:[%s301 + $0xa0] sm:$0xff]
        %v393 = vld [vmem:[%s301 + $0xa8] sm:$0xff]
        %v394 = vld [vmem:[%s301 + $0xb0] sm:$0xff]
        %v395 = vld [vmem:[%s301 + $0xb8] sm:$0xff]
        %v396 = vld [vmem:[%s301 + $0xc0] sm:$0xff]
        %v397 = vld [vmem:[%s301 + $0xc8] sm:$0xff]
        %v398 = vld [vmem:[%s301 + $0xd0] sm:$0xff]
        %v399 = vld [vmem:[%s301 + $0xd8] sm:$0xff]
        %v400 = vld [vmem:[%s301 + $0xe0] sm:$0xff]
        %v401 = vld [vmem:[%s301 + $0xe8] sm:$0xff]
        %v402 = vld [vmem:[%s301 + $0xf0] sm:$0xff]
        %v403 = vld [vmem:[%s301 + $0xf8] sm:$0xff]
        %v406 = vunpack.c.l.b16 %v370
        %v407 = vunpack.c.h.b16 %v370
        %v408 = vunpack.c.l.b16 %v371
        %v409 = vunpack.c.h.b16 %v371
        %v410 = vpack.c.b16 %v408, %v406
        %v411 = vpack.c.b16 %v409, %v407
        %v446 = vunpack.c.l.b16 %v372
        %v447 = vunpack.c.h.b16 %v372
        %v448 = vunpack.c.l.b16 %v373
        %v449 = vunpack.c.h.b16 %v373
        %v450 = vunpack.c.l.b16 %v374
        %v451 = vunpack.c.h.b16 %v374
        %v452 = vunpack.c.l.b16 %v375
        %v453 = vunpack.c.h.b16 %v375
        %v454 = vunpack.c.l.b16 %v376
        %v455 = vunpack.c.h.b16 %v376
        %v456 = vunpack.c.l.b16 %v377
        %v457 = vunpack.c.h.b16 %v377
        %v458 = vunpack.c.l.b16 %v378
        %v459 = vunpack.c.h.b16 %v378
        %v460 = vunpack.c.l.b16 %v379
        %v461 = vunpack.c.h.b16 %v379
        %v462 = vunpack.c.l.b16 %v380
        %v463 = vunpack.c.h.b16 %v380
        %v464 = vunpack.c.l.b16 %v381
        %v465 = vunpack.c.h.b16 %v381
        %v466 = vunpack.c.l.b16 %v382
        %v467 = vunpack.c.h.b16 %v382
        %v468 = vunpack.c.l.b16 %v383
        %v469 = vunpack.c.h.b16 %v383
        %v470 = vunpack.c.l.b16 %v384
        %v471 = vunpack.c.h.b16 %v384
        %v472 = vunpack.c.l.b16 %v385
        %v473 = vunpack.c.h.b16 %v385
        %v474 = vunpack.c.l.b16 %v386
        %v475 = vunpack.c.h.b16 %v386
        %v476 = vunpack.c.l.b16 %v387
        %v477 = vunpack.c.h.b16 %v387
        %v478 = vunpack.c.l.b16 %v388
        %v479 = vunpack.c.h.b16 %v388
        %v480 = vunpack.c.l.b16 %v389
        %v481 = vunpack.c.h.b16 %v389
        %v482 = vunpack.c.l.b16 %v390
        %v483 = vunpack.c.h.b16 %v390
        %v484 = vunpack.c.l.b16 %v391
        %v485 = vunpack.c.h.b16 %v391
        %v486 = vunpack.c.l.b16 %v392
        %v487 = vunpack.c.h.b16 %v392
        %v488 = vunpack.c.l.b16 %v393
        %v489 = vunpack.c.h.b16 %v393
        %v490 = vunpack.c.l.b16 %v394
        %v491 = vunpack.c.h.b16 %v394
        %v492 = vunpack.c.l.b16 %v395
        %v493 = vunpack.c.h.b16 %v395
        %v494 = vunpack.c.l.b16 %v396
        %v495 = vunpack.c.h.b16 %v396
        %v496 = vunpack.c.l.b16 %v397
        %v497 = vunpack.c.h.b16 %v397
        %v498 = vunpack.c.l.b16 %v398
        %v499 = vunpack.c.h.b16 %v398
        %v500 = vunpack.c.l.b16 %v399
        %v501 = vunpack.c.h.b16 %v399
        %v502 = vunpack.c.l.b16 %v400
        %v503 = vunpack.c.h.b16 %v400
        %v504 = vunpack.c.l.b16 %v401
        %v505 = vunpack.c.h.b16 %v401
        %v506 = vunpack.c.l.b16 %v402
        %v507 = vunpack.c.h.b16 %v402
        %v508 = vunpack.c.l.b16 %v403
        %v509 = vunpack.c.h.b16 %v403
        %v510 = vpack.c.b16 %v448, %v446
        %v511 = vpack.c.b16 %v449, %v447
        %v512 = vpack.c.b16 %v452, %v450
        %v513 = vpack.c.b16 %v453, %v451
        %v514 = vpack.c.b16 %v456, %v454
        %v515 = vpack.c.b16 %v457, %v455
        %v516 = vpack.c.b16 %v460, %v458
        %v517 = vpack.c.b16 %v461, %v459
        %v518 = vpack.c.b16 %v464, %v462
        %v519 = vpack.c.b16 %v465, %v463
        %v520 = vpack.c.b16 %v468, %v466
        %v521 = vpack.c.b16 %v469, %v467
        %v522 = vpack.c.b16 %v472, %v470
        %v523 = vpack.c.b16 %v473, %v471
        %v524 = vpack.c.b16 %v476, %v474
        %v525 = vpack.c.b16 %v477, %v475
        %v526 = vpack.c.b16 %v480, %v478
        %v527 = vpack.c.b16 %v481, %v479
        %v528 = vpack.c.b16 %v484, %v482
        %v529 = vpack.c.b16 %v485, %v483
        %v530 = vpack.c.b16 %v488, %v486
        %v531 = vpack.c.b16 %v489, %v487
        %v532 = vpack.c.b16 %v492, %v490
        %v533 = vpack.c.b16 %v493, %v491
        %v534 = vpack.c.b16 %v496, %v494
        %v535 = vpack.c.b16 %v497, %v495
        %v536 = vpack.c.b16 %v500, %v498
        %v537 = vpack.c.b16 %v501, %v499
        %v538 = vpack.c.b16 %v504, %v502
        %v539 = vpack.c.b16 %v505, %v503
        %v540 = vpack.c.b16 %v508, %v506
        %v541 = vpack.c.b16 %v509, %v507
        %574 = vmatprep.subr.bf16.mxu0 %v525
        %575 = vmatpush1.bf16.xpose.msra.mxu0 %v524
        %576 = vmatprep.subr.bf16.mxu0 %v523
        %577 = vmatpush1.bf16.xpose.msra.mxu0 %v522
        %578 = vmatprep.subr.bf16.mxu0 %v521
        %579 = vmatpush1.bf16.xpose.msra.mxu0 %v520
        %580 = vmatprep.subr.bf16.mxu0 %v519
        %581 = vmatpush1.bf16.xpose.msra.mxu0 %v518
        %582 = vmatprep.subr.bf16.mxu0 %v517
        %583 = vmatpush1.bf16.xpose.msra.mxu0 %v516
        %584 = vmatprep.subr.bf16.mxu0 %v515
        %585 = vmatpush1.bf16.xpose.msra.mxu0 %v514
        %586 = vmatprep.subr.bf16.mxu0 %v513
        %587 = vmatpush1.bf16.xpose.msra.mxu0 %v512
        %588 = vmatprep.subr.bf16.mxu0 %v511
        %589 = vmatpush1.bf16.xpose.msra.mxu0 %v510
        %590 = vmatprep.subr.bf16.mxu0 %v541
        %591 = vmatpush2.bf16.xpose.msra.mxu0 %v540
        %592 = vmatprep.subr.bf16.mxu0 %v539
        %593 = vmatpush2.bf16.xpose.msra.mxu0 %v538
        %594 = vmatprep.subr.bf16.mxu0 %v537
        %595 = vmatpush2.bf16.xpose.msra.mxu0 %v536
        %596 = vmatprep.subr.bf16.mxu0 %v535
        %597 = vmatpush2.bf16.xpose.msra.mxu0 %v534
        %598 = vmatprep.subr.bf16.mxu0 %v533
        %599 = vmatpush2.bf16.xpose.msra.mxu0 %v532
        %600 = vmatprep.subr.bf16.mxu0 %v531
        %601 = vmatpush2.bf16.xpose.msra.mxu0 %v530
        %602 = vmatprep.subr.bf16.mxu0 %v529
        %603 = vmatpush2.bf16.xpose.msra.mxu0 %v528
        %604 = vmatprep.subr.bf16.mxu0 %v527
        %605 = vmatpush2.bf16.xpose.msra.mxu0 %v526
        %606 = vmatprep.mubr.bf16.mxu0 %v411
        %607 = vmatmul.mubr.bf16.gmra.mxu0 %v410
        %v608 = vpop.f32.mrf.mxu0
        %v609 = vadd.f32 0.0, %v608
        %v610 = vpop.f32.mrf.mxu0
        %v611 = vadd.f32 0.0, %v610
        %v612 = vpop.f32.mrf.mxu0
        %v613 = vadd.f32 0.0, %v612
        %v614 = vpop.f32.mrf.mxu0
        %v615 = vadd.f32 0.0, %v614
        %616 = vdwg.mxu0
        %v617 = vadd.f32 %v366, %v609
        %v618 = vadd.f32 %v367, %v611
        %v619 = vadd.f32 %v368, %v613
        %v620 = vadd.f32 %v369, %v615
        %621 = vst [vmem:[#allocation2] sm:$0xff] %v617
        %622 = vst [vmem:[#allocation2 + $0x8] sm:$0xff] %v618
        %623 = vst [vmem:[#allocation2 + $0x10] sm:$0xff] %v619
        %624 = vst [vmem:[#allocation2 + $0x18] sm:$0xff] %v620
        %p625 = scmp.eq.s32.totalorder %s34, 1
        // Predicated region
        $region57: #{tpu_custom_call.1} parent=35 // pred_check
          %p626 = pneg %p625
        $region58: #{tpu_custom_call.1} parent=35 // pred_check_branch
          %628 = sbr.rel (%p626) target = $region60
        $region59: #{tpu_custom_call.1} parent=35 // pred_region
          %v629 = vld [vmem:[#allocation8] sm:$0xf]
          %v630 = vld [vmem:[#allocation8 + $0x4] sm:$0xf]
          %v631 = vld [vmem:[%s314] sm:$0xf]
          %v632 = vld [vmem:[%s314 + $0x4] sm:$0xf]
          %v633 = vld [vmem:[%s314 + $0x8] sm:$0xf]
          %v634 = vld [vmem:[%s314 + $0xc] sm:$0xf]
          %v635 = vld [vmem:[%s314 + $0x10] sm:$0xf]
          %v636 = vld [vmem:[%s314 + $0x14] sm:$0xf]
          %v637 = vld [vmem:[%s314 + $0x18] sm:$0xf]
          %v638 = vld [vmem:[%s314 + $0x1c] sm:$0xf]
          %v639 = vld [vmem:[%s314 + $0x20] sm:$0xf]
          %v640 = vld [vmem:[%s314 + $0x24] sm:$0xf]
          %v641 = vld [vmem:[%s314 + $0x28] sm:$0xf]
          %v642 = vld [vmem:[%s314 + $0x2c] sm:$0xf]
          %v643 = vld [vmem:[%s314 + $0x30] sm:$0xf]
          %v644 = vld [vmem:[%s314 + $0x34] sm:$0xf]
          %v645 = vld [vmem:[%s314 + $0x38] sm:$0xf]
          %v646 = vld [vmem:[%s314 + $0x3c] sm:$0xf]
          %v647 = vld [vmem:[%s314 + $0x40] sm:$0xf]
          %v648 = vld [vmem:[%s314 + $0x44] sm:$0xf]
          %v649 = vld [vmem:[%s314 + $0x48] sm:$0xf]
          %v650 = vld [vmem:[%s314 + $0x4c] sm:$0xf]
          %v651 = vld [vmem:[%s314 + $0x50] sm:$0xf]
          %v652 = vld [vmem:[%s314 + $0x54] sm:$0xf]
          %v653 = vld [vmem:[%s314 + $0x58] sm:$0xf]
          %v654 = vld [vmem:[%s314 + $0x5c] sm:$0xf]
          %v655 = vld [vmem:[%s314 + $0x60] sm:$0xf]
          %v656 = vld [vmem:[%s314 + $0x64] sm:$0xf]
          %v657 = vld [vmem:[%s314 + $0x68] sm:$0xf]
          %v658 = vld [vmem:[%s314 + $0x6c] sm:$0xf]
          %v659 = vld [vmem:[%s314 + $0x70] sm:$0xf]
          %v660 = vld [vmem:[%s314 + $0x74] sm:$0xf]
          %v661 = vld [vmem:[%s314 + $0x78] sm:$0xf]
          %v662 = vld [vmem:[%s314 + $0x7c] sm:$0xf]
          %v665 = vunpack.c.l.b16 %v629
          %v666 = vunpack.c.l.b16 %v630
          %v667 = vpack.c.b16 %v666, %v665
          %v701 = vunpack.c.l.b16 %v631
          %v702 = vunpack.c.l.b16 %v632
          %v703 = vunpack.c.l.b16 %v633
          %v704 = vunpack.c.l.b16 %v634
          %v705 = vunpack.c.l.b16 %v635
          %v706 = vunpack.c.l.b16 %v636
          %v707 = vunpack.c.l.b16 %v637
          %v708 = vunpack.c.l.b16 %v638
          %v709 = vunpack.c.l.b16 %v639
          %v710 = vunpack.c.l.b16 %v640
          %v711 = vunpack.c.l.b16 %v641
          %v712 = vunpack.c.l.b16 %v642
          %v713 = vunpack.c.l.b16 %v643
          %v714 = vunpack.c.l.b16 %v644
          %v715 = vunpack.c.l.b16 %v645
          %v716 = vunpack.c.l.b16 %v646
          %v717 = vunpack.c.l.b16 %v647
          %v718 = vunpack.c.l.b16 %v648
          %v719 = vunpack.c.l.b16 %v649
          %v720 = vunpack.c.l.b16 %v650
          %v721 = vunpack.c.l.b16 %v651
          %v722 = vunpack.c.l.b16 %v652
          %v723 = vunpack.c.l.b16 %v653
          %v724 = vunpack.c.l.b16 %v654
          %v725 = vunpack.c.l.b16 %v655
          %v726 = vunpack.c.l.b16 %v656
          %v727 = vunpack.c.l.b16 %v657
          %v728 = vunpack.c.l.b16 %v658
          %v729 = vunpack.c.l.b16 %v659
          %v730 = vunpack.c.l.b16 %v660
          %v731 = vunpack.c.l.b16 %v661
          %v732 = vunpack.c.l.b16 %v662
          %v733 = vpack.c.b16 %v702, %v701
          %v734 = vpack.c.b16 %v704, %v703
          %v735 = vpack.c.b16 %v706, %v705
          %v736 = vpack.c.b16 %v708, %v707
          %v737 = vpack.c.b16 %v710, %v709
          %v738 = vpack.c.b16 %v712, %v711
          %v739 = vpack.c.b16 %v714, %v713
          %v740 = vpack.c.b16 %v716, %v715
          %v741 = vpack.c.b16 %v718, %v717
          %v742 = vpack.c.b16 %v720, %v719
          %v743 = vpack.c.b16 %v722, %v721
          %v744 = vpack.c.b16 %v724, %v723
          %v745 = vpack.c.b16 %v726, %v725
          %v746 = vpack.c.b16 %v728, %v727
          %v747 = vpack.c.b16 %v730, %v729
          %v748 = vpack.c.b16 %v732, %v731
          %765 = vmatprep.subr.bf16.mxu0 0
          %766 = vmatpush1.bf16.xpose.msra.mxu0 %v740
          %767 = vmatprep.subr.bf16.mxu0 0
          %768 = vmatpush1.bf16.xpose.msra.mxu0 %v739
          %769 = vmatprep.subr.bf16.mxu0 0
          %770 = vmatpush1.bf16.xpose.msra.mxu0 %v738
          %771 = vmatprep.subr.bf16.mxu0 0
          %772 = vmatpush1.bf16.xpose.msra.mxu0 %v737
          %773 = vmatprep.subr.bf16.mxu0 0
          %774 = vmatpush1.bf16.xpose.msra.mxu0 %v736
          %775 = vmatprep.subr.bf16.mxu0 0
          %776 = vmatpush1.bf16.xpose.msra.mxu0 %v735
          %777 = vmatprep.subr.bf16.mxu0 0
          %778 = vmatpush1.bf16.xpose.msra.mxu0 %v734
          %779 = vmatprep.subr.bf16.mxu0 0
          %780 = vmatpush1.bf16.xpose.msra.mxu0 %v733
          %781 = vmatprep.subr.bf16.mxu0 0
          %782 = vmatpush2.bf16.xpose.msra.mxu0 %v748
          %783 = vmatprep.subr.bf16.mxu0 0
          %784 = vmatpush2.bf16.xpose.msra.mxu0 %v747
          %785 = vmatprep.subr.bf16.mxu0 0
          %786 = vmatpush2.bf16.xpose.msra.mxu0 %v746
          %787 = vmatprep.subr.bf16.mxu0 0
          %788 = vmatpush2.bf16.xpose.msra.mxu0 %v745
          %789 = vmatprep.subr.bf16.mxu0 0
          %790 = vmatpush2.bf16.xpose.msra.mxu0 %v744
          %791 = vmatprep.subr.bf16.mxu0 0
          %792 = vmatpush2.bf16.xpose.msra.mxu0 %v743
          %793 = vmatprep.subr.bf16.mxu0 0
          %794 = vmatpush2.bf16.xpose.msra.mxu0 %v742
          %795 = vmatprep.subr.bf16.mxu0 0
          %796 = vmatpush2.bf16.xpose.msra.mxu0 %v741
          %797 = vmatprep.mubr.bf16.mxu0 0
          %798 = vmatmul.mubr.bf16.gmra.mxu0 %v667
          %v799 = vpop.f32.mrf.mxu0
          %v800 = vadd.f32 0.0, %v799
          %v801 = vpop.f32.mrf.mxu0
          %v802 = vadd.f32 0.0, %v801
          %v803 = vpop.f32.mrf.mxu0
          %v804 = vadd.f32 0.0, %v803
          %v805 = vpop.f32.mrf.mxu0
          %v806 = vadd.f32 0.0, %v805
          %807 = vdwg.mxu0
          %v808 = vld [vmem:[#allocation2] sm:$0xff]
          %v809 = vld [vmem:[#allocation2 + $0x8] sm:$0xff]
          %v810 = vld [vmem:[#allocation2 + $0x10] sm:$0xff]
          %v811 = vld [vmem:[#allocation2 + $0x18] sm:$0xff]
          %v812 = vadd.f32 %v808, %v800
          %v813 = vadd.f32 %v809, %v802
          %v814 = vadd.f32 %v810, %v804
          %v815 = vadd.f32 %v811, %v806
          %816 = vst [vmem:[%s348] sm:$0xff] %v812
          %817 = vst [vmem:[%s348 + $0x8] sm:$0xff] %v813
          %818 = vst [vmem:[%s348 + $0x10] sm:$0xff] %v814
          %819 = vst [vmem:[%s348 + $0x18] sm:$0xff] %v815
        $region60: #{tpu_custom_call.1} parent=35 // pred_fallthru
          _
        %s820 = sand.u32 %s164, 1
        %s821 = scalar_lea.sflag [#allocation5], %s820
        %s822 = sand.u32 %s164, 1
        %s823 = smul.addr %s822, 32
        %s824 = scalar_lea.vmem [#allocation11], %s823
        // Predicated region
        $region61: #{tpu_custom_call.1} parent=35 // pred_check
          %p825 = pneg %p174
        $region62: #{tpu_custom_call.1} parent=35 // pred_check_branch
          %827 = sbr.rel (%p825) target = $region64
        $region63: #{tpu_custom_call.1} parent=35 // pred_region
          %s828 = smul.u32 2, %s32
          %s829 = smul.u32 2, %s33
          %s831 = ssub.s32 512, 512
          %832 = vsyncadd %s821, %s831
          %s833 = smul.addr %s828, 4
          %s834 = sadd.s32 %s829, %s833
          %s835 = smul.addr %s834, 128
          %s836 = scalar_lea.hbm %s4, %s835
          %s837 = sshll.u32 %s824, 4
          %s838 = int_to_ptr.vmem [resolvable:$true] %s837
          %843 = dma.vmem_to_hbm [thread:$0]  %s838, 512, %s836, %s821, 256, 512, 16
        $region64: #{tpu_custom_call.1} parent=35 // pred_fallthru
          _
      $region36: #{tpu_custom_call.1} parent=5 // pred_fallthru
        _
      %p844 = scmp.le.s32.totalorder 2, %s22
      // Predicated region
      $region65: #{tpu_custom_call.1} parent=5 // pred_check
        %p845 = pneg %p844
      $region66: #{tpu_custom_call.1} parent=5 // pred_check_branch
        %847 = sbr.rel (%p845) target = $region68
      $region67: #{tpu_custom_call.1} parent=5 // pred_region
        %s848 = ssub.s32 %s22, 2
        // Predicated region
        $region69: #{tpu_custom_call.1} parent=67 // pred_check
          %p849 = pneg %p180
        $region70: #{tpu_custom_call.1} parent=67 // pred_check_branch
          %851 = sbr.rel (%p849) target = $region72
        $region71: #{tpu_custom_call.1} parent=67 // pred_region
          %s852 = sand.u32 %s165, 1
          %s853 = scalar_lea.sflag [#allocation5], %s852
          %s854 = sand.u32 %s165, 1
          %s855 = smul.addr %s854, 32
          %s856 = scalar_lea.vmem [#allocation11], %s855
          %857 = dma.done %s853, 512
        $region72: #{tpu_custom_call.1} parent=67 // pred_fallthru
          _
      $region68: #{tpu_custom_call.1} parent=5 // pred_fallthru
        _
    $region6: #{tpu_custom_call.1} parent=1 // loop_footer
      %s26 = sadd.s32 1, %s22
    $region7: #{tpu_custom_call.1} parent=1 // loop_footer_branch
      %21 = sbr.rel target = $region3
    $region8: #{tpu_custom_call.1} parent=1 // loop_exit
      _
    %858 = vsyncpa [#allocation4], 1
    %s859 = scalar_lea.sflag [#allocation4], 1
    %860 = vsyncpa %s859, 1
    %861 = vsyncpa [#allocation7], 1
    %s862 = scalar_lea.sflag [#allocation7], 1
    %863 = vsyncpa %s862, 1
    %864 = vsyncpa [#allocation10], 1
    %s865 = scalar_lea.sflag [#allocation10], 1
    %866 = vsyncpa %s865, 1
    %867 = vsyncpa [#allocation5], 1
    %s868 = scalar_lea.sflag [#allocation5], 1
    %869 = vsyncpa %s868, 1

</llo_original>
